<compile_context>
chip_gen: v6e
topology: v6e:2x2x1
jax: 0.10.0
libtpu: 0.0.40
codegen_flags: <defaults>
</compile_context>

<pallas_src>
import functools
import math

import jax
import jax.numpy as jnp
from jax import lax
from jax.experimental import pallas as pl
from jax.experimental.pallas import tpu as pltpu


def arcface_kernel(flags_ref, x_ref, w_ref, label_ref, out_ref,
                   *, s, cos_m, sin_m, th, mm, tn):
    # flags_ref: (num_tiles,) int32 in SMEM (scalar prefetch): tile has a label col
    # x_ref:     (B, D)   float32   (already row-normalized in the wrapper)
    # w_ref:     (TN, D)  float32 or bfloat16 (tile of class weights)
    # label_ref: (B, 1)   int32     (class index per row)
    # out_ref:   (B, TN)  float32
    x_n = x_ref[...]
    w = w_ref[...].astype(jnp.float32)

    # F.normalize clamp: max(||w||, 1e-12) == rsqrt(max(||w||^2, 1e-24)).
    eps2 = jnp.float32(1e-24)
    w_inv = lax.rsqrt(jnp.maximum(jnp.sum(w * w, axis=-1, keepdims=True), eps2))
    w_n = w * w_inv

    # cosine[b, n] = <x_n[b], w_n[n]> -> contract last dims (MXU handles the
    # transposed rhs natively; no wrapper-side weight transpose needed).
    cosine = lax.dot_general(
        x_n, w_n, (((1,), (1,)), ((), ())), preferred_element_type=jnp.float32
    )

    j = pl.program_id(0)
    has_label = flags_ref[j] != 0

    @pl.when(jnp.logical_not(has_label))
    def _():
        # No label falls in this class tile: one_hot == 0 everywhere.
        out_ref[...] = s * cosine

    @pl.when(has_label)
    def _():
        sine = jnp.sqrt(jnp.clip(1.0 - cosine * cosine, 0.0, 1.0))
        phi = cosine * cos_m - sine * sin_m
        phi = jnp.where(cosine > th, phi, cosine - mm)
        col = lax.broadcasted_iota(jnp.int32, cosine.shape, 1) + j * tn
        # Single compare+select replaces the float one-hot arithmetic.
        out_ref[...] = s * jnp.where(col == label_ref[...], phi, cosine)


def arcface_forward(x, weight, label, *, s=64.0, m=0.5, tn=256):
    """x: [B, D], weight: [N, D] (f32 or bf16), label: [B] int -> [B, N] f32."""
    B, D = x.shape
    N, D2 = weight.shape
    assert D == D2
    # TODO(synk): arbitrary class counts need padding of N to a multiple of tn
    # plus masking of the padded columns before any downstream softmax/loss.
    assert N % tn == 0, "pad out_features to a multiple of tn"
    num_tiles = N // tn

    cos_m = math.cos(m)
    sin_m = math.sin(m)
    th = math.cos(math.pi - m)
    mm = math.sin(math.pi - m) * m

    # Hoist input normalization out of the class-tiled grid loop: one tiny XLA
    # op on [B, D] instead of redoing the reduce+divide every grid step.
    x = x.astype(jnp.float32)
    x_n = x * lax.rsqrt(jnp.maximum(jnp.sum(x * x, axis=-1, keepdims=True), 1e-24))

    label = label.astype(jnp.int32)
    label2d = label.reshape(B, 1)
    # Per-tile "contains at least one label column" flag (scalar-prefetched to
    # SMEM) so the margin math runs only on the <= B tiles that need it.
    tile_flags = jnp.zeros((num_tiles,), jnp.int32).at[label // tn].set(1)

    kernel = functools.partial(
        arcface_kernel, s=s, cos_m=cos_m, sin_m=sin_m, th=th, mm=mm, tn=tn
    )

    # VMEM budget: double-buffered weight tiles + double-buffered output tiles
    # + resident x block + labels, with 2x headroom (re-derives for v7x 64 MiB).
    est = (2 * tn * D * weight.dtype.itemsize    # weight double buffer
           + 2 * B * tn * 4                      # output double buffer
           + B * D * 4 + 4 * B                   # x block + labels
           + (1 << 20))                          # misc scratch
    vmem_limit = min(max(2 * est, 16 * 1024 * 1024), 100 * 1024 * 1024)

    return pl.pallas_call(
        kernel,
        out_shape=jax.ShapeDtypeStruct((B, N), jnp.float32),
        grid_spec=pltpu.PrefetchScalarGridSpec(
            num_scalar_prefetch=1,
            grid=(num_tiles,),
            in_specs=[
                pl.BlockSpec((B, D), lambda j, flags: (0, 0)),    # x_n: resident
                pl.BlockSpec((tn, D), lambda j, flags: (j, 0)),   # weight tile
                pl.BlockSpec((B, 1), lambda j, flags: (0, 0)),    # labels
            ],
            out_specs=pl.BlockSpec((B, tn), lambda j, flags: (0, j)),
        ),
        compiler_params=pltpu.CompilerParams(
            dimension_semantics=("parallel",),   # class axis shards across TCs (v7x)
            vmem_limit_bytes=vmem_limit,
        ),
    )(tile_flags, x_n, weight, label2d)


def arcface_reference(x, weight, label, *, s=64.0, m=0.5):
    eps = 1e-12
    x_n = x / jnp.maximum(jnp.linalg.norm(x, axis=-1, keepdims=True), eps)
    w_n = weight / jnp.maximum(jnp.linalg.norm(weight, axis=-1, keepdims=True), eps)
    cosine = x_n @ w_n.T
    sine = jnp.sqrt(jnp.clip(1.0 - cosine**2, 0.0, 1.0))
    phi = cosine * math.cos(m) - sine * math.sin(m)
    phi = jnp.where(cosine > math.cos(math.pi - m), phi, cosine - math.sin(math.pi - m) * m)
    one_hot = jax.nn.one_hot(label, weight.shape[0], dtype=jnp.float32)
    return s * (one_hot * phi + (1.0 - one_hot) * cosine)


if __name__ == "__main__":
    # Small demo shapes (production note: at B=8 this is a mem-bound weight
    # stream; raise the batch and/or pass bf16 weights for real throughput).
    B, IN_FEATURES, OUT_FEATURES = 8, 32, 512

    key = jax.random.PRNGKey(0)
    kx, kw, kl = jax.random.split(key, 3)

    x = jax.random.normal(kx, (B, IN_FEATURES), dtype=jnp.float32)

    # nn.init.xavier_uniform_ on (out_features, in_features):
    bound = math.sqrt(6.0 / (IN_FEATURES + OUT_FEATURES))
    weight = jax.random.uniform(
        kw, (OUT_FEATURES, IN_FEATURES), minval=-bound, maxval=bound, dtype=jnp.float32
    )

    label = jax.random.randint(kl, (B,), 0, OUT_FEATURES, dtype=jnp.int32)

    out = arcface_forward(x, weight, label, s=64.0, m=0.5, tn=256)
    out = jax.block_until_ready(out)

    ref = arcface_reference(x, weight, label, s=64.0, m=0.5)
    assert out.shape == (B, OUT_FEATURES)
    assert jnp.allclose(out, ref, atol=1e-3, rtol=1e-3)

    print("KERNEL_OK")
</pallas_src>

<mosaic_0001>
module attributes {stable_mosaic.version = 11 : i64} {
  func.func @arcface_kernel(%arg0: i32, %arg1: memref<2xi32, #tpu.memory_space<smem>>, %arg2: memref<8x32xf32, #tpu.memory_space<vmem>>, %arg3: memref<256x32xf32, #tpu.memory_space<vmem>>, %arg4: memref<8x1xi32, #tpu.memory_space<vmem>>, %arg5: memref<8x256xf32, #tpu.memory_space<vmem>>) attributes {dimension_semantics = [#tpu.dimension_semantics<parallel>], iteration_bounds = array<i64: 2>, scalar_prefetch = 1 : i64, scratch_operands = 0 : i64, tpu.core_type = #tpu.core_type<tc>, window_params = [{pipeline_mode = #tpu.pipeline_mode<synchronous>, transform_indices = @transform_0, window_bounds = array<i64: 8, 32>}, {transform_indices = @transform_1, window_bounds = array<i64: 256, 32>}, {pipeline_mode = #tpu.pipeline_mode<synchronous>, transform_indices = @transform_2, window_bounds = array<i64: 8, 1>}, {transform_indices = @transform_3, window_bounds = array<i64: 8, 256>}]} {
    %c0 = arith.constant 0 : index
    %c0_0 = arith.constant 0 : index
    %0 = vector.load %arg2[%c0, %c0_0] : memref<8x32xf32, #tpu.memory_space<vmem>>, vector<8x32xf32>
    %c0_1 = arith.constant 0 : index
    %c0_2 = arith.constant 0 : index
    %1 = vector.load %arg3[%c0_1, %c0_2] : memref<256x32xf32, #tpu.memory_space<vmem>>, vector<256x32xf32>
    %2 = arith.mulf %1, %1 : vector<256x32xf32>
    %cst = arith.constant dense<0.000000e+00> : vector<256xf32>
    %3 = vector.multi_reduction <add>, %2, %cst [1] : vector<256x32xf32> to vector<256xf32>
    %4 = vector.shape_cast %3 : vector<256xf32> to vector<256x1xf32>
    %cst_3 = arith.constant 1.000000e-24 : f32
    %5 = vector.broadcast %cst_3 : f32 to vector<256x1xf32>
    %6 = arith.maximumf %4, %5 : vector<256x1xf32>
    %7 = math.rsqrt %6 : vector<256x1xf32>
    %8 = vector.broadcast %7 : vector<256x1xf32> to vector<256x32xf32>
    %9 = arith.mulf %1, %8 : vector<256x32xf32>
    %cst_4 = arith.constant dense<0.000000e+00> : vector<8x256xf32>
    %10 = tpu.matmul %0, %9, %cst_4 {dimension_numbers = #tpu.dot_dimension_numbers<[1], [1], [0], [0], [0, 0, 1, 0], [], []>} : vector<8x32xf32>, vector<256x32xf32>, vector<8x256xf32> -> vector<8x256xf32>
    %11 = arith.index_cast %arg0 : i32 to index
    %12 = memref.load %arg1[%11] : memref<2xi32, #tpu.memory_space<smem>>
    %c0_i32 = arith.constant 0 : i32
    %13 = arith.cmpi ne, %12, %c0_i32 : i32
    %true = arith.constant true
    %14 = arith.xori %13, %true : i1
    %15 = arith.extui %14 : i1 to i32
    %c0_i32_5 = arith.constant 0 : i32
    %16 = arith.cmpi ne, %15, %c0_i32_5 : i32
    scf.if %16 {
      %cst_7 = arith.constant 6.400000e+01 : f32
      %19 = vector.broadcast %cst_7 : f32 to vector<8x256xf32>
      %20 = arith.mulf %19, %10 : vector<8x256xf32>
      %c0_8 = arith.constant 0 : index
      %c0_9 = arith.constant 0 : index
      %21 = vector.load %arg5[%c0_8, %c0_9] : memref<8x256xf32, #tpu.memory_space<vmem>>, vector<8x256xf32>
      tpu.vector_store %arg5[%c0_8, %c0_9], %20 {strides = array<i32>} : memref<8x256xf32, #tpu.memory_space<vmem>>, vector<8x256xf32>,
    } else {
    }
    %17 = arith.extui %13 : i1 to i32
    %c0_i32_6 = arith.constant 0 : i32
    %18 = arith.cmpi ne, %17, %c0_i32_6 : i32
    scf.if %18 {
      %19 = arith.mulf %10, %10 : vector<8x256xf32>
      %cst_7 = arith.constant 1.000000e+00 : f32
      %20 = vector.broadcast %cst_7 : f32 to vector<8x256xf32>
      %21 = arith.subf %20, %19 : vector<8x256xf32>
      %cst_8 = arith.constant 0.000000e+00 : f32
      %cst_9 = arith.constant 1.000000e+00 : f32
      %22 = vector.broadcast %cst_8 : f32 to vector<8x256xf32>
      %23 = arith.maximumf %22, %21 : vector<8x256xf32>
      %24 = vector.broadcast %cst_9 : f32 to vector<8x256xf32>
      %25 = arith.minimumf %24, %23 : vector<8x256xf32>
      %26 = math.sqrt %25 : vector<8x256xf32>
      %cst_10 = arith.constant 0.87758255 : f32
      %27 = vector.broadcast %cst_10 : f32 to vector<8x256xf32>
      %28 = arith.mulf %10, %27 : vector<8x256xf32>
      %cst_11 = arith.constant 0.47942555 : f32
      %29 = vector.broadcast %cst_11 : f32 to vector<8x256xf32>
      %30 = arith.mulf %26, %29 : vector<8x256xf32>
      %31 = arith.subf %28, %30 : vector<8x256xf32>
      %cst_12 = arith.constant -0.87758255 : f32
      %32 = vector.broadcast %cst_12 : f32 to vector<8x256xf32>
      %33 = arith.cmpf ogt, %10, %32 : vector<8x256xf32>
      %cst_13 = arith.constant 0.239712775 : f32
      %34 = vector.broadcast %cst_13 : f32 to vector<8x256xf32>
      %35 = arith.subf %10, %34 : vector<8x256xf32>
      %36 = arith.select %33, %31, %35 : vector<8x256xi1>, vector<8x256xf32>
      %37 = tpu.iota {dimensions = array<i32: 1>} : vector<8x256xi32>
      %c256_i32 = arith.constant 256 : i32
      %38 = arith.muli %arg0, %c256_i32 : i32
      %39 = vector.broadcast %38 : i32 to vector<8x256xi32>
      %40 = arith.addi %37, %39 : vector<8x256xi32>
      %c0_14 = arith.constant 0 : index
      %c0_15 = arith.constant 0 : index
      %41 = vector.load %arg4[%c0_14, %c0_15] : memref<8x1xi32, #tpu.memory_space<vmem>>, vector<8x1xi32>
      %42 = vector.broadcast %41 : vector<8x1xi32> to vector<8x256xi32>
      %43 = arith.cmpi eq, %40, %42 : vector<8x256xi32>
      %44 = arith.select %43, %36, %10 : vector<8x256xi1>, vector<8x256xf32>
      %cst_16 = arith.constant 6.400000e+01 : f32
      %45 = vector.broadcast %cst_16 : f32 to vector<8x256xf32>
      %46 = arith.mulf %45, %44 : vector<8x256xf32>
      %c0_17 = arith.constant 0 : index
      %c0_18 = arith.constant 0 : index
      %47 = vector.load %arg5[%c0_17, %c0_18] : memref<8x256xf32, #tpu.memory_space<vmem>>, vector<8x256xf32>
      tpu.vector_store %arg5[%c0_17, %c0_18], %46 {strides = array<i32>} : memref<8x256xf32, #tpu.memory_space<vmem>>, vector<8x256xf32>,
    } else {
    }
    return
  }
  func.func @transform_0(%arg0: i32, %arg1: memref<2xi32, #tpu.memory_space<smem>>) -> (i32, i32) {
    %c0_i32 = arith.constant 0 : i32
    %c0_i32_0 = arith.constant 0 : i32
    %c0_i32_1 = arith.constant 0 : i32
    return %c0_i32, %c0_i32_0 : i32, i32
  }
  func.func @transform_1(%arg0: i32, %arg1: memref<2xi32, #tpu.memory_space<smem>>) -> (i32, i32) {
    %c0_i32 = arith.constant 0 : i32
    %c0_i32_0 = arith.constant 0 : i32
    return %arg0, %c0_i32 : i32, i32
  }
  func.func @transform_2(%arg0: i32, %arg1: memref<2xi32, #tpu.memory_space<smem>>) -> (i32, i32) {
    %c0_i32 = arith.constant 0 : i32
    %c0_i32_0 = arith.constant 0 : i32
    %c0_i32_1 = arith.constant 0 : i32
    return %c0_i32, %c0_i32_0 : i32, i32
  }
  func.func @transform_3(%arg0: i32, %arg1: memref<2xi32, #tpu.memory_space<smem>>) -> (i32, i32) {
    %c0_i32 = arith.constant 0 : i32
    %c0_i32_0 = arith.constant 0 : i32
    return %c0_i32, %arg0 : i32, i32
  }
}

</mosaic_0001>

<llo_original>
// kernel: tpu_custom_call.1
$region0: #{tpu_custom_call.1}
  #allocation0 [shape = 'u32[]', space=smem, size = 0x4, offset = 0x4, fixed_abs, tag = 'smem constant byte address 0x4 - core index']
  #allocation1 [shape = 'u32[144,128]{1,0:T(1,128)}', space=vmem, size = 0x12000, scoped, tag = 'internal scratch']
  #allocation2 [shape = 's32[1]{0}', space=sflag, size = 0x4, scoped, tag = 'scoped memory for tpu_custom_call.1']
  #allocation3 [shape = 'u8[512]{0}', space=smem, size = 0x200, scoped, tag = 'prefetched SMEM operand 0']
  %s0 = inlined_call_operand.vmem [shape: s32[2], index: 0, kind: input, shape index: {}]
  %s1 = inlined_call_operand.vmem [shape: f32[8,32], index: 1, kind: input, shape index: {}]
  %s2 = inlined_call_operand.vmem [shape: f32[512,32], index: 2, kind: input, shape index: {}]
  %s3 = inlined_call_operand.vmem [shape: s32[8,1], index: 3, kind: input, shape index: {}]
  %s4 = inlined_call_operand.hbm [shape: f32[8,512], index: 4, kind: output, shape index: {}]
  %s5 = sld [smem:[#allocation0]]
  $region53: #{tpu_custom_call.1} parent=0
    _
  %s7 = ssub.s32 1, %s5
  %s8 = scalar_select 0, %s7, %s5
  %s9 = sshll.u32 %s0, 4
  %s10 = int_to_ptr.vmem [resolvable:$true] %s9
  %12 = dma.vmem_to_smem %s10, 16, [#allocation3], [#allocation2]
  %13 = dma.done [#allocation2], 16
  %14 = sfence
  $region1: #{tpu_custom_call.1} parent=0
    #allocation4 [shape = 'u8[16384]{0}', space=vmem, size = 0x4000, scoped, tag = 'output window, operand 0']
    #allocation5 [shape = 's32[2]{0}', space=sflag, size = 0x8, scoped, tag = 'scoped memory for tpu_custom_call.1']
    %15 = vsyncpa [#allocation5], 0
    %s16 = scalar_lea.sflag [#allocation5], 1
    %17 = vsyncpa %s16, 0
    loop: start=0, step=1, limit=4
    $region2: #{tpu_custom_call.1} parent=1 // loop_pre_header
      _
    $region3: #{tpu_custom_call.1} parent=1 // loop_header
      %s19 = sphi 0, %s23
      %p20 = scmp.ge.s32.totalorder %s19, 4
      %s27 = sphi 0, %s27
      %s29 = sphi 0, %s27
      %s30 = sphi 0, %s29
      %s44 = sphi 0, %s30
      %s50 = sphi 0, %s52
      %s53 = sphi 0, %s50
      %s54 = sphi 0, %s53
      %s70 = sphi 0, %s54
      %s74 = sphi 0, %s74
      %s76 = sphi 0, %s74
      %s77 = sphi 0, %s76
      %s91 = sphi 0, %s77
      %s97 = sphi 0, %s99
      %s100 = sphi 0, %s97
      %s101 = sphi 0, %s100
      %s117 = sphi 0, %s101
    $region4: #{tpu_custom_call.1} parent=1 // loop_header_branch
      %22 = sbr.rel (%p20) target = $region8
    $region5: #{tpu_custom_call.1} parent=1 // loop_body
      %s24 = ssub.s32 %s19, 1
      %s25 = ssub.s32 %s19, 2
      %s26 = sadd.s32 %s19, 1
      %s28 = sadd.s32 %s27, 1
      %p31 = scmp.eq.s32.totalorder %s19, 1
      %p32 = scmp.ne.s32.totalorder %s27, %s29
      %p33 = scmp.eq.s32.totalorder %s19, 0
      %p34 = por %p32, %p33
      %p35 = scmp.ne.s32.totalorder %s27, %s29
      %p36 = scmp.eq.s32.totalorder %s24, 1
      %p37 = por %p35, %p36
      %p38 = scmp.ne.s32.totalorder %s29, %s30
      %p39 = scmp.eq.s32.totalorder %s24, 0
      %p40 = por %p38, %p39
      %p41 = scmp.ne.s32.totalorder %s29, %s30
      %p42 = scmp.eq.s32.totalorder %s25, 1
      %p43 = por %p41, %p42
      %p45 = scmp.ne.s32.totalorder %s30, %s44
      %p46 = scmp.eq.s32.totalorder %s25, 0
      %p47 = por %p45, %p46
      %s48 = ssub.s32 %s19, %s26
      %p49 = scmp.eq.s32.totalorder %s48, 0
      %s51 = sadd.s32 %s50, 1
      %s52 = scalar_select %p49, %s50, %s51
      %p55 = pneg %p49
      %p56 = scmp.eq.s32.totalorder %s19, 1
      %p57 = por %p55, %p56
      %p58 = scmp.ne.s32.totalorder %s50, %s53
      %p59 = scmp.eq.s32.totalorder %s19, 0
      %p60 = por %p58, %p59
      %p61 = scmp.ne.s32.totalorder %s50, %s53
      %p62 = scmp.eq.s32.totalorder %s24, 1
      %p63 = por %p61, %p62
      %p64 = scmp.ne.s32.totalorder %s53, %s54
      %p65 = scmp.eq.s32.totalorder %s24, 0
      %p66 = por %p64, %p65
      %p67 = scmp.ne.s32.totalorder %s53, %s54
      %p68 = scmp.eq.s32.totalorder %s25, 1
      %p69 = por %p67, %p68
      %p71 = scmp.ne.s32.totalorder %s54, %s70
      %p72 = scmp.eq.s32.totalorder %s25, 0
      %p73 = por %p71, %p72
      %s75 = sadd.s32 %s74, 1
      %p78 = scmp.eq.s32.totalorder %s19, 1
      %p79 = scmp.ne.s32.totalorder %s74, %s76
      %p80 = scmp.eq.s32.totalorder %s19, 0
      %p81 = por %p79, %p80
      %p82 = scmp.ne.s32.totalorder %s74, %s76
      %p83 = scmp.eq.s32.totalorder %s24, 1
      %p84 = por %p82, %p83
      %p85 = scmp.ne.s32.totalorder %s76, %s77
      %p86 = scmp.eq.s32.totalorder %s24, 0
      %p87 = por %p85, %p86
      %p88 = scmp.ne.s32.totalorder %s76, %s77
      %p89 = scmp.eq.s32.totalorder %s25, 1
      %p90 = por %p88, %p89
      %p92 = scmp.ne.s32.totalorder %s77, %s91
      %p93 = scmp.eq.s32.totalorder %s25, 0
      %p94 = por %p92, %p93
      %s95 = ssub.s32 %s19, %s26
      %p96 = scmp.eq.s32.totalorder %s95, 0
      %s98 = sadd.s32 %s97, 1
      %s99 = scalar_select %p96, %s97, %s98
      %p102 = pneg %p96
      %p103 = scmp.eq.s32.totalorder %s19, 1
      %p104 = por %p102, %p103
      %p105 = scmp.ne.s32.totalorder %s97, %s100
      %p106 = scmp.eq.s32.totalorder %s19, 0
      %p107 = por %p105, %p106
      %p108 = scmp.ne.s32.totalorder %s97, %s100
      %p109 = scmp.eq.s32.totalorder %s24, 1
      %p110 = por %p108, %p109
      %p111 = scmp.ne.s32.totalorder %s100, %s101
      %p112 = scmp.eq.s32.totalorder %s24, 0
      %p113 = por %p111, %p112
      %p114 = scmp.ne.s32.totalorder %s100, %s101
      %p115 = scmp.eq.s32.totalorder %s25, 1
      %p116 = por %p114, %p115
      %p118 = scmp.ne.s32.totalorder %s101, %s117
      %p119 = scmp.eq.s32.totalorder %s25, 0
      %p120 = por %p118, %p119
      %p121 = scmp.le.s32.totalorder 1, %s19
      %p122 = scmp.lt.s32.totalorder %s19, 3
      %p123 = pnand %p121, %p122
      %p124 = pneg %p123
      // Predicated region
      $region9: #{tpu_custom_call.1} parent=5 // pred_check
        _
      $region10: #{tpu_custom_call.1} parent=5 // pred_check_branch
        %126 = sbr.rel (%p123) target = $region12
      $region11: #{tpu_custom_call.1} parent=5 // pred_region
        %s127 = ssub.s32 %s19, 1
        // Predicated region
        $region13: #{tpu_custom_call.1} parent=11 // pred_check
          %p128 = pneg %p40
        $region14: #{tpu_custom_call.1} parent=11 // pred_check_branch
          %130 = sbr.rel (%p128) target = $region16
        $region15: #{tpu_custom_call.1} parent=11 // pred_region
          _
        $region16: #{tpu_custom_call.1} parent=11 // pred_fallthru
          _
        // Predicated region
        $region17: #{tpu_custom_call.1} parent=11 // pred_check
          %p131 = pneg %p87
        $region18: #{tpu_custom_call.1} parent=11 // pred_check_branch
          %133 = sbr.rel (%p131) target = $region20
        $region19: #{tpu_custom_call.1} parent=11 // pred_region
          _
        $region20: #{tpu_custom_call.1} parent=11 // pred_fallthru
          _
      $region12: #{tpu_custom_call.1} parent=5 // pred_fallthru
        _
      %p134 = scmp.lt.s32.totalorder %s19, 2
      // Predicated region
      $region21: #{tpu_custom_call.1} parent=5 // pred_check
        %p135 = pneg %p134
      $region22: #{tpu_custom_call.1} parent=5 // pred_check_branch
        %137 = sbr.rel (%p135) target = $region24
      $region23: #{tpu_custom_call.1} parent=5 // pred_region
        // Predicated region
        $region25: #{tpu_custom_call.1} parent=23 // pred_check
          %p138 = pneg %p60
        $region26: #{tpu_custom_call.1} parent=23 // pred_check_branch
          %140 = sbr.rel (%p138) target = $region28
        $region27: #{tpu_custom_call.1} parent=23 // pred_region
          %s141 = smul.u32 32, %s19
          %p142 = scmp.lt.s32.totalorder %s141, 63
          %s143 = scalar_select %p142, %s141, 63
          %s144 = smul.addr %s143, 8
          %s145 = scalar_lea.vmem %s2, %s144
          %s146 = smul.u32 32, %s19
        $region28: #{tpu_custom_call.1} parent=23 // pred_fallthru
          _
      $region24: #{tpu_custom_call.1} parent=5 // pred_fallthru
        _
      %p147 = scmp.le.s32.totalorder 1, %s19
      %p148 = scmp.lt.s32.totalorder %s19, 3
      %p149 = pnand %p147, %p148
      %p150 = pneg %p149
      // Predicated region
      $region29: #{tpu_custom_call.1} parent=5 // pred_check
        _
      $region30: #{tpu_custom_call.1} parent=5 // pred_check_branch
        %152 = sbr.rel (%p149) target = $region32
      $region31: #{tpu_custom_call.1} parent=5 // pred_region
        %s153 = ssub.s32 %s19, 1
        %p154 = pneg %p40
        %p155 = pneg %p37
        %s156 = smul.u32 32, %s24
        %p157 = scmp.lt.s32.totalorder %s156, 63
        %s158 = scalar_select %p157, %s156, 63
        %s159 = smul.addr %s158, 8
        %s160 = scalar_lea.vmem %s2, %s159
        %p161 = pneg %p66
        %p162 = pneg %p63
        %p163 = pneg %p87
        %p164 = pneg %p84
        %p165 = pneg %p113
        %p166 = pneg %p110
        %s167 = sand.u32 %s100, 1
        %s168 = scalar_lea.sflag [#allocation5], %s167
        %s169 = sand.u32 %s100, 1
        %s170 = smul.addr %s169, 16
        %s171 = scalar_lea.vmem [#allocation4], %s170
        %s172 = smul.u32 32, %s24
        %p173 = scmp.lt.s32.totalorder %s172, 63
        %s174 = scalar_select %p173, %s172, 63
        %s175 = smul.addr %s174, 8
        %s176 = scalar_lea.vmem %s2, %s175
        %s177 = smul.u32 32, %s24
        %s178 = smul.u32 2, %s24
        %v179 = vld [vmem:[%s1] sm:$0xff]
        %v180 = vld [vmem:[%s176] sm:$0xff]
        %v181 = vld [vmem:[%s176 + $0x8] sm:$0xff]
        %v182 = vld [vmem:[%s176 + $0x10] sm:$0xff]
        %v183 = vld [vmem:[%s176 + $0x18] sm:$0xff]
        %v184 = vld [vmem:[%s176 + $0x20] sm:$0xff]
        %v185 = vld [vmem:[%s176 + $0x28] sm:$0xff]
        %v186 = vld [vmem:[%s176 + $0x30] sm:$0xff]
        %v187 = vld [vmem:[%s176 + $0x38] sm:$0xff]
        %v188 = vld [vmem:[%s176 + $0x40] sm:$0xff]
        %v189 = vld [vmem:[%s176 + $0x48] sm:$0xff]
        %v190 = vld [vmem:[%s176 + $0x50] sm:$0xff]
        %v191 = vld [vmem:[%s176 + $0x58] sm:$0xff]
        %v192 = vld [vmem:[%s176 + $0x60] sm:$0xff]
        %v193 = vld [vmem:[%s176 + $0x68] sm:$0xff]
        %v194 = vld [vmem:[%s176 + $0x70] sm:$0xff]
        %v195 = vld [vmem:[%s176 + $0x78] sm:$0xff]
        %v196 = vld [vmem:[%s176 + $0x80] sm:$0xff]
        %v197 = vld [vmem:[%s176 + $0x88] sm:$0xff]
        %v198 = vld [vmem:[%s176 + $0x90] sm:$0xff]
        %v199 = vld [vmem:[%s176 + $0x98] sm:$0xff]
        %v200 = vld [vmem:[%s176 + $0xa0] sm:$0xff]
        %v201 = vld [vmem:[%s176 + $0xa8] sm:$0xff]
        %v202 = vld [vmem:[%s176 + $0xb0] sm:$0xff]
        %v203 = vld [vmem:[%s176 + $0xb8] sm:$0xff]
        %v204 = vld [vmem:[%s176 + $0xc0] sm:$0xff]
        %v205 = vld [vmem:[%s176 + $0xc8] sm:$0xff]
        %v206 = vld [vmem:[%s176 + $0xd0] sm:$0xff]
        %v207 = vld [vmem:[%s176 + $0xd8] sm:$0xff]
        %v208 = vld [vmem:[%s176 + $0xe0] sm:$0xff]
        %v209 = vld [vmem:[%s176 + $0xe8] sm:$0xff]
        %v210 = vld [vmem:[%s176 + $0xf0] sm:$0xff]
        %v211 = vld [vmem:[%s176 + $0xf8] sm:$0xff]
        %v212 = vmul.f32 %v180, %v180
        %v213 = vmul.f32 %v181, %v181
        %v214 = vmul.f32 %v182, %v182
        %v215 = vmul.f32 %v183, %v183
        %v216 = vmul.f32 %v184, %v184
        %v217 = vmul.f32 %v185, %v185
        %v218 = vmul.f32 %v186, %v186
        %v219 = vmul.f32 %v187, %v187
        %v220 = vmul.f32 %v188, %v188
        %v221 = vmul.f32 %v189, %v189
        %v222 = vmul.f32 %v190, %v190
        %v223 = vmul.f32 %v191, %v191
        %v224 = vmul.f32 %v192, %v192
        %v225 = vmul.f32 %v193, %v193
        %v226 = vmul.f32 %v194, %v194
        %v227 = vmul.f32 %v195, %v195
        %v228 = vmul.f32 %v196, %v196
        %v229 = vmul.f32 %v197, %v197
        %v230 = vmul.f32 %v198, %v198
        %v231 = vmul.f32 %v199, %v199
        %v232 = vmul.f32 %v200, %v200
        %v233 = vmul.f32 %v201, %v201
        %v234 = vmul.f32 %v202, %v202
        %v235 = vmul.f32 %v203, %v203
        %v236 = vmul.f32 %v204, %v204
        %v237 = vmul.f32 %v205, %v205
        %v238 = vmul.f32 %v206, %v206
        %v239 = vmul.f32 %v207, %v207
        %v240 = vmul.f32 %v208, %v208
        %v241 = vmul.f32 %v209, %v209
        %v242 = vmul.f32 %v210, %v210
        %v243 = vmul.f32 %v211, %v211
        %vm244 = vcmask 261120
        %v245 = vsel %vm244, %v212, 0.0
        %246 = vadd.xlane.f32.xlu0 %v245
        %v247 = vpop.xlane.xlu0 %246
        %v248 = vsel %vm244, %v213, 0.0
        %249 = vadd.xlane.f32.xlu0 %v248
        %v250 = vpop.xlane.xlu0 %249
        %v251 = vsel %vm244, %v214, 0.0
        %252 = vadd.xlane.f32.xlu0 %v251
        %v253 = vpop.xlane.xlu0 %252
        %v254 = vsel %vm244, %v215, 0.0
        %255 = vadd.xlane.f32.xlu0 %v254
        %v256 = vpop.xlane.xlu0 %255
        %v257 = vsel %vm244, %v216, 0.0
        %258 = vadd.xlane.f32.xlu0 %v257
        %v259 = vpop.xlane.xlu0 %258
        %v260 = vsel %vm244, %v217, 0.0
        %261 = vadd.xlane.f32.xlu0 %v260
        %v262 = vpop.xlane.xlu0 %261
        %v263 = vsel %vm244, %v218, 0.0
        %264 = vadd.xlane.f32.xlu0 %v263
        %v265 = vpop.xlane.xlu0 %264
        %v266 = vsel %vm244, %v219, 0.0
        %267 = vadd.xlane.f32.xlu0 %v266
        %v268 = vpop.xlane.xlu0 %267
        %v269 = vsel %vm244, %v220, 0.0
        %270 = vadd.xlane.f32.xlu0 %v269
        %v271 = vpop.xlane.xlu0 %270
        %v272 = vsel %vm244, %v221, 0.0
        %273 = vadd.xlane.f32.xlu0 %v272
        %v274 = vpop.xlane.xlu0 %273
        %v275 = vsel %vm244, %v222, 0.0
        %276 = vadd.xlane.f32.xlu0 %v275
        %v277 = vpop.xlane.xlu0 %276
        %v278 = vsel %vm244, %v223, 0.0
        %279 = vadd.xlane.f32.xlu0 %v278
        %v280 = vpop.xlane.xlu0 %279
        %v281 = vsel %vm244, %v224, 0.0
        %282 = vadd.xlane.f32.xlu0 %v281
        %v283 = vpop.xlane.xlu0 %282
        %v284 = vsel %vm244, %v225, 0.0
        %285 = vadd.xlane.f32.xlu0 %v284
        %v286 = vpop.xlane.xlu0 %285
        %v287 = vsel %vm244, %v226, 0.0
        %288 = vadd.xlane.f32.xlu0 %v287
        %v289 = vpop.xlane.xlu0 %288
        %v290 = vsel %vm244, %v227, 0.0
        %291 = vadd.xlane.f32.xlu0 %v290
        %v292 = vpop.xlane.xlu0 %291
        %v293 = vsel %vm244, %v228, 0.0
        %294 = vadd.xlane.f32.xlu0 %v293
        %v295 = vpop.xlane.xlu0 %294
        %v296 = vsel %vm244, %v229, 0.0
        %297 = vadd.xlane.f32.xlu0 %v296
        %v298 = vpop.xlane.xlu0 %297
        %v299 = vsel %vm244, %v230, 0.0
        %300 = vadd.xlane.f32.xlu0 %v299
        %v301 = vpop.xlane.xlu0 %300
        %v302 = vsel %vm244, %v231, 0.0
        %303 = vadd.xlane.f32.xlu0 %v302
        %v304 = vpop.xlane.xlu0 %303
        %v305 = vsel %vm244, %v232, 0.0
        %306 = vadd.xlane.f32.xlu0 %v305
        %v307 = vpop.xlane.xlu0 %306
        %v308 = vsel %vm244, %v233, 0.0
        %309 = vadd.xlane.f32.xlu0 %v308
        %v310 = vpop.xlane.xlu0 %309
        %v311 = vsel %vm244, %v234, 0.0
        %312 = vadd.xlane.f32.xlu0 %v311
        %v313 = vpop.xlane.xlu0 %312
        %v314 = vsel %vm244, %v235, 0.0
        %315 = vadd.xlane.f32.xlu0 %v314
        %v316 = vpop.xlane.xlu0 %315
        %v317 = vsel %vm244, %v236, 0.0
        %318 = vadd.xlane.f32.xlu0 %v317
        %v319 = vpop.xlane.xlu0 %318
        %v320 = vsel %vm244, %v237, 0.0
        %321 = vadd.xlane.f32.xlu0 %v320
        %v322 = vpop.xlane.xlu0 %321
        %v323 = vsel %vm244, %v238, 0.0
        %324 = vadd.xlane.f32.xlu0 %v323
        %v325 = vpop.xlane.xlu0 %324
        %v326 = vsel %vm244, %v239, 0.0
        %327 = vadd.xlane.f32.xlu0 %v326
        %v328 = vpop.xlane.xlu0 %327
        %v329 = vsel %vm244, %v240, 0.0
        %330 = vadd.xlane.f32.xlu0 %v329
        %v331 = vpop.xlane.xlu0 %330
        %v332 = vsel %vm244, %v241, 0.0
        %333 = vadd.xlane.f32.xlu0 %v332
        %v334 = vpop.xlane.xlu0 %333
        %v335 = vsel %vm244, %v242, 0.0
        %336 = vadd.xlane.f32.xlu0 %v335
        %v337 = vpop.xlane.xlu0 %336
        %v338 = vsel %vm244, %v243, 0.0
        %339 = vadd.xlane.f32.xlu0 %v338
        %v340 = vpop.xlane.xlu0 %339
        %v341 = vmax.f32 %v247, 1e-24
        %v342 = vmax.f32 %v250, 1e-24
        %v343 = vmax.f32 %v253, 1e-24
        %v344 = vmax.f32 %v256, 1e-24
        %v345 = vmax.f32 %v259, 1e-24
        %v346 = vmax.f32 %v262, 1e-24
        %v347 = vmax.f32 %v265, 1e-24
        %v348 = vmax.f32 %v268, 1e-24
        %v349 = vmax.f32 %v271, 1e-24
        %v350 = vmax.f32 %v274, 1e-24
        %v351 = vmax.f32 %v277, 1e-24
        %v352 = vmax.f32 %v280, 1e-24
        %v353 = vmax.f32 %v283, 1e-24
        %v354 = vmax.f32 %v286, 1e-24
        %v355 = vmax.f32 %v289, 1e-24
        %v356 = vmax.f32 %v292, 1e-24
        %v357 = vmax.f32 %v295, 1e-24
        %v358 = vmax.f32 %v298, 1e-24
        %v359 = vmax.f32 %v301, 1e-24
        %v360 = vmax.f32 %v304, 1e-24
        %v361 = vmax.f32 %v307, 1e-24
        %v362 = vmax.f32 %v310, 1e-24
        %v363 = vmax.f32 %v313, 1e-24
        %v364 = vmax.f32 %v316, 1e-24
        %v365 = vmax.f32 %v319, 1e-24
        %v366 = vmax.f32 %v322, 1e-24
        %v367 = vmax.f32 %v325, 1e-24
        %v368 = vmax.f32 %v328, 1e-24
        %v369 = vmax.f32 %v331, 1e-24
        %v370 = vmax.f32 %v334, 1e-24
        %v371 = vmax.f32 %v337, 1e-24
        %v372 = vmax.f32 %v340, 1e-24
        %v373 = vrsqrt.pop %v341
        %v374 = vrsqrt.pop %v342
        %v375 = vrsqrt.pop %v343
        %v376 = vrsqrt.pop %v344
        %v377 = vrsqrt.pop %v345
        %v378 = vrsqrt.pop %v346
        %v379 = vrsqrt.pop %v347
        %v380 = vrsqrt.pop %v348
        %v381 = vrsqrt.pop %v349
        %v382 = vrsqrt.pop %v350
        %v383 = vrsqrt.pop %v351
        %v384 = vrsqrt.pop %v352
        %v385 = vrsqrt.pop %v353
        %v386 = vrsqrt.pop %v354
        %v387 = vrsqrt.pop %v355
        %v388 = vrsqrt.pop %v356
        %v389 = vrsqrt.pop %v357
        %v390 = vrsqrt.pop %v358
        %v391 = vrsqrt.pop %v359
        %v392 = vrsqrt.pop %v360
        %v393 = vrsqrt.pop %v361
        %v394 = vrsqrt.pop %v362
        %v395 = vrsqrt.pop %v363
        %v396 = vrsqrt.pop %v364
        %v397 = vrsqrt.pop %v365
        %v398 = vrsqrt.pop %v366
        %v399 = vrsqrt.pop %v367
        %v400 = vrsqrt.pop %v368
        %v401 = vrsqrt.pop %v369
        %v402 = vrsqrt.pop %v370
        %v403 = vrsqrt.pop %v371
        %v404 = vrsqrt.pop %v372
        %v405 = vmul.f32 %v180, %v373
        %v406 = vmul.f32 %v181, %v374
        %v407 = vmul.f32 %v182, %v375
        %v408 = vmul.f32 %v183, %v376
        %v409 = vmul.f32 %v184, %v377
        %v410 = vmul.f32 %v185, %v378
        %v411 = vmul.f32 %v186, %v379
        %v412 = vmul.f32 %v187, %v380
        %v413 = vmul.f32 %v188, %v381
        %v414 = vmul.f32 %v189, %v382
        %v415 = vmul.f32 %v190, %v383
        %v416 = vmul.f32 %v191, %v384
        %v417 = vmul.f32 %v192, %v385
        %v418 = vmul.f32 %v193, %v386
        %v419 = vmul.f32 %v194, %v387
        %v420 = vmul.f32 %v195, %v388
        %v421 = vmul.f32 %v196, %v389
        %v422 = vmul.f32 %v197, %v390
        %v423 = vmul.f32 %v198, %v391
        %v424 = vmul.f32 %v199, %v392
        %v425 = vmul.f32 %v200, %v393
        %v426 = vmul.f32 %v201, %v394
        %v427 = vmul.f32 %v202, %v395
        %v428 = vmul.f32 %v203, %v396
        %v429 = vmul.f32 %v204, %v397
        %v430 = vmul.f32 %v205, %v398
        %v431 = vmul.f32 %v206, %v399
        %v432 = vmul.f32 %v207, %v400
        %v433 = vmul.f32 %v208, %v401
        %v434 = vmul.f32 %v209, %v402
        %v435 = vmul.f32 %v210, %v403
        %v436 = vmul.f32 %v211, %v404
        %v438 = vsel %vm244, %v179, 0
        %v441 = vsel %vm244, %v405, 0
        %v444 = vsel %vm244, %v406, 0
        %v447 = vsel %vm244, %v407, 0
        %v450 = vsel %vm244, %v408, 0
        %v453 = vsel %vm244, %v409, 0
        %v456 = vsel %vm244, %v410, 0
        %v459 = vsel %vm244, %v411, 0
        %v462 = vsel %vm244, %v412, 0
        %v465 = vsel %vm244, %v413, 0
        %v468 = vsel %vm244, %v414, 0
        %v471 = vsel %vm244, %v415, 0
        %v474 = vsel %vm244, %v416, 0
        %v477 = vsel %vm244, %v417, 0
        %v480 = vsel %vm244, %v418, 0
        %v483 = vsel %vm244, %v419, 0
        %v486 = vsel %vm244, %v420, 0
        %v489 = vsel %vm244, %v421, 0
        %v492 = vsel %vm244, %v422, 0
        %v495 = vsel %vm244, %v423, 0
        %v498 = vsel %vm244, %v424, 0
        %v501 = vsel %vm244, %v425, 0
        %v504 = vsel %vm244, %v426, 0
        %v507 = vsel %vm244, %v427, 0
        %v510 = vsel %vm244, %v428, 0
        %v513 = vsel %vm244, %v429, 0
        %v516 = vsel %vm244, %v430, 0
        %v519 = vsel %vm244, %v431, 0
        %v522 = vsel %vm244, %v432, 0
        %v525 = vsel %vm244, %v433, 0
        %v528 = vsel %vm244, %v434, 0
        %v531 = vsel %vm244, %v435, 0
        %v534 = vsel %vm244, %v436, 0
        %536 = vmatprep.subr.mxu0 0.0
        %537 = vmatpush1.xpose.msra.mxu0 %v486
        %538 = vmatprep.subr.mxu0 0.0
        %539 = vmatpush1.xpose.msra.mxu0 %v483
        %540 = vmatprep.subr.mxu0 0.0
        %541 = vmatpush1.xpose.msra.mxu0 %v480
        %542 = vmatprep.subr.mxu0 0.0
        %543 = vmatpush1.xpose.msra.mxu0 %v477
        %544 = vmatprep.subr.mxu0 0.0
        %545 = vmatpush1.xpose.msra.mxu0 %v474
        %546 = vmatprep.subr.mxu0 0.0
        %547 = vmatpush1.xpose.msra.mxu0 %v471
        %548 = vmatprep.subr.mxu0 0.0
        %549 = vmatpush1.xpose.msra.mxu0 %v468
        %550 = vmatprep.subr.mxu0 0.0
        %551 = vmatpush1.xpose.msra.mxu0 %v465
        %552 = vmatprep.subr.mxu0 0.0
        %553 = vmatpush1.xpose.msra.mxu0 %v462
        %554 = vmatprep.subr.mxu0 0.0
        %555 = vmatpush1.xpose.msra.mxu0 %v459
        %556 = vmatprep.subr.mxu0 0.0
        %557 = vmatpush1.xpose.msra.mxu0 %v456
        %558 = vmatprep.subr.mxu0 0.0
        %559 = vmatpush1.xpose.msra.mxu0 %v453
        %560 = vmatprep.subr.mxu0 0.0
        %561 = vmatpush1.xpose.msra.mxu0 %v450
        %562 = vmatprep.subr.mxu0 0.0
        %563 = vmatpush1.xpose.msra.mxu0 %v447
        %564 = vmatprep.subr.mxu0 0.0
        %565 = vmatpush1.xpose.msra.mxu0 %v444
        %566 = vmatprep.subr.mxu0 0.0
        %567 = vmatpush1.xpose.msra.mxu0 %v441
        %568 = vmatprep.subr.mxu0 0.0
        %569 = vmatpush2.xpose.msra.mxu0 %v534
        %570 = vmatprep.subr.mxu0 0.0
        %571 = vmatpush2.xpose.msra.mxu0 %v531
        %572 = vmatprep.subr.mxu0 0.0
        %573 = vmatpush2.xpose.msra.mxu0 %v528
        %574 = vmatprep.subr.mxu0 0.0
        %575 = vmatpush2.xpose.msra.mxu0 %v525
        %576 = vmatprep.subr.mxu0 0.0
        %577 = vmatpush2.xpose.msra.mxu0 %v522
        %578 = vmatprep.subr.mxu0 0.0
        %579 = vmatpush2.xpose.msra.mxu0 %v519
        %580 = vmatprep.subr.mxu0 0.0
        %581 = vmatpush2.xpose.msra.mxu0 %v516
        %582 = vmatprep.subr.mxu0 0.0
        %583 = vmatpush2.xpose.msra.mxu0 %v513
        %584 = vmatprep.subr.mxu0 0.0
        %585 = vmatpush2.xpose.msra.mxu0 %v510
        %586 = vmatprep.subr.mxu0 0.0
        %587 = vmatpush2.xpose.msra.mxu0 %v507
        %588 = vmatprep.subr.mxu0 0.0
        %589 = vmatpush2.xpose.msra.mxu0 %v504
        %590 = vmatprep.subr.mxu0 0.0
        %591 = vmatpush2.xpose.msra.mxu0 %v501
        %592 = vmatprep.subr.mxu0 0.0
        %593 = vmatpush2.xpose.msra.mxu0 %v498
        %594 = vmatprep.subr.mxu0 0.0
        %595 = vmatpush2.xpose.msra.mxu0 %v495
        %596 = vmatprep.subr.mxu0 0.0
        %597 = vmatpush2.xpose.msra.mxu0 %v492
        %598 = vmatprep.subr.mxu0 0.0
        %599 = vmatpush2.xpose.msra.mxu0 %v489
        %600 = vmatprep.mubr.f32.mxu0 0.0
        %601 = vmatmul.mubr.f32.gmra.mxu0 %v438
        %v602 = vpop.f32.mrf.mxu0
        %v603 = vadd.f32 0.0, %v602
        %v604 = vpop.f32.mrf.mxu0
        %v605 = vadd.f32 0.0, %v604
        %606 = vdwg.mxu0
        %s607 = sld [smem:[#allocation3 + %s24]]
        %p608 = scmp.ne.s32.totalorder %s607, 0
        %p609 = scmp.eq.s32.totalorder %s607, 0
        // Predicated region
        $region33: #{tpu_custom_call.1} parent=31 // pred_check
          %p610 = pneg %p609
        $region34: #{tpu_custom_call.1} parent=31 // pred_check_branch
          %612 = sbr.rel (%p610) target = $region36
        $region35: #{tpu_custom_call.1} parent=31 // pred_region
          %v613 = vmul.f32 %v603, 64.0
          %v614 = vmul.f32 %v605, 64.0
          %615 = vst [vmem:[%s171] sm:$0xff] %v613
          %616 = vst [vmem:[%s171 + $0x8] sm:$0xff] %v614
        $region36: #{tpu_custom_call.1} parent=31 // pred_fallthru
          _
        // Predicated region
        $region37: #{tpu_custom_call.1} parent=31 // pred_check
          %p617 = pneg %p608
        $region38: #{tpu_custom_call.1} parent=31 // pred_check_branch
          %619 = sbr.rel (%p617) target = $region40
        $region39: #{tpu_custom_call.1} parent=31 // pred_region
          %v620 = vmul.f32 %v603, %v603
          %v621 = vmul.f32 %v605, %v605
          %v622 = vsub.f32 1.0, %v620
          %v623 = vsub.f32 1.0, %v621
          %v624 = vmax.f32 %v622, 0.0
          %v625 = vmax.f32 %v623, 0.0
          %v626 = vmin.f32 %v624, 1.0
          %v627 = vmin.f32 %v625, 1.0
          %v628 = vrsqrt.pop %v626
          %v629 = vmul.f32 %v626, %v628
          %vm630 = vcmp.eq.f32.partialorder %v626, inf
          %v631 = vsel %vm630, %v626, %v629
          %vm632 = vcmp.eq.f32.partialorder %v626, 0.0
          %v633 = vand.u32 %v626, 2147483648
          %v634 = vsel %vm632, %v633, %v631
          %v635 = vrsqrt.pop %v627
          %v636 = vmul.f32 %v627, %v635
          %vm637 = vcmp.eq.f32.partialorder %v627, inf
          %v638 = vsel %vm637, %v627, %v636
          %vm639 = vcmp.eq.f32.partialorder %v627, 0.0
          %v640 = vand.u32 %v627, 2147483648
          %v641 = vsel %vm639, %v640, %v638
          %v642 = vmul.f32 %v603, 0.87758255
          %v643 = vmul.f32 %v605, 0.87758255
          %v644 = vmul.f32 %v634, 0.47942555
          %v645 = vmul.f32 %v641, 0.47942555
          %v646 = vsub.f32 %v642, %v644
          %v647 = vsub.f32 %v643, %v645
          %vm648 = vcmp.gt.f32.partialorder %v603, -0.87758255
          %vm649 = vcmp.gt.f32.partialorder %v605, -0.87758255
          %v650 = vsub.f32 %v603, 0.23971277
          %v651 = vsub.f32 %v605, 0.23971277
          %v652 = vsel %vm648, %v646, %v650
          %v653 = vsel %vm649, %v647, %v651
          %v654 = vlaneseq
          %v655 = vand.u32 %v654, 127
          %v656 = vadd.s32 %v655, 128
          %s657 = smul.u32 %s24, 256
          %v658 = vstv %s657
          %v659 = vadd.s32 %v655, %v658
          %v660 = vadd.s32 %v656, %v658
          %v661 = vld [vmem:[%s3] sm:$0xff]
          %662 = vset.pattern.permute.xlu0 0
          %663 = vperm.xlu0 %662, %v661
          %v664 = vpop.permute.xlu0 %663
          %vm665 = vcmp.eq.s32.totalorder %v659, %v664
          %vm666 = vcmp.eq.s32.totalorder %v660, %v664
          %v667 = vsel %vm665, %v652, %v603
          %v668 = vsel %vm666, %v653, %v605
          %v669 = vmul.f32 %v667, 64.0
          %v670 = vmul.f32 %v668, 64.0
          %671 = vst [vmem:[%s171] sm:$0xff] %v669
          %672 = vst [vmem:[%s171 + $0x8] sm:$0xff] %v670
        $region40: #{tpu_custom_call.1} parent=31 // pred_fallthru
          _
        %s673 = sand.u32 %s100, 1
        %s674 = scalar_lea.sflag [#allocation5], %s673
        %s675 = sand.u32 %s100, 1
        %s676 = smul.addr %s675, 16
        %s677 = scalar_lea.vmem [#allocation4], %s676
        // Predicated region
        $region41: #{tpu_custom_call.1} parent=31 // pred_check
          %p678 = pneg %p110
        $region42: #{tpu_custom_call.1} parent=31 // pred_check_branch
          %680 = sbr.rel (%p678) target = $region44
        $region43: #{tpu_custom_call.1} parent=31 // pred_region
          %s681 = smul.u32 2, %s24
          %s683 = ssub.s32 256, 256
          %684 = vsyncadd %s674, %s683
          %s685 = smul.addr %s681, 128
          %s686 = scalar_lea.hbm %s4, %s685
          %s688 = sshll.u32 %s677, 4
          %s689 = int_to_ptr.vmem [resolvable:$true] %s688
          %691 = dma.vmem_to_hbm [thread:$0]  %s689, 256, %s686, %s674
        $region44: #{tpu_custom_call.1} parent=31 // pred_fallthru
          _
      $region32: #{tpu_custom_call.1} parent=5 // pred_fallthru
        _
      %p692 = scmp.le.s32.totalorder 2, %s19
      // Predicated region
      $region45: #{tpu_custom_call.1} parent=5 // pred_check
        %p693 = pneg %p692
      $region46: #{tpu_custom_call.1} parent=5 // pred_check_branch
        %695 = sbr.rel (%p693) target = $region48
      $region47: #{tpu_custom_call.1} parent=5 // pred_region
        %s696 = ssub.s32 %s19, 2
        // Predicated region
        $region49: #{tpu_custom_call.1} parent=47 // pred_check
          %p697 = pneg %p116
        $region50: #{tpu_custom_call.1} parent=47 // pred_check_branch
          %699 = sbr.rel (%p697) target = $region52
        $region51: #{tpu_custom_call.1} parent=47 // pred_region
          %s700 = sand.u32 %s101, 1
          %s701 = scalar_lea.sflag [#allocation5], %s700
          %s702 = sand.u32 %s101, 1
          %s703 = smul.addr %s702, 16
          %s704 = scalar_lea.vmem [#allocation4], %s703
          %705 = dma.done %s701, 256
        $region52: #{tpu_custom_call.1} parent=47 // pred_fallthru
          _
      $region48: #{tpu_custom_call.1} parent=5 // pred_fallthru
        _
    $region6: #{tpu_custom_call.1} parent=1 // loop_footer
      %s23 = sadd.s32 1, %s19
    $region7: #{tpu_custom_call.1} parent=1 // loop_footer_branch
      %18 = sbr.rel target = $region3
    $region8: #{tpu_custom_call.1} parent=1 // loop_exit
      _
    %706 = vsyncpa [#allocation5], 1
    %s707 = scalar_lea.sflag [#allocation5], 1
    %708 = vsyncpa %s707, 1

</llo_original>
